<compile_context>
chip_gen: v7x
topology: tpu7x:2x2x1
jax: 0.10.0
libtpu: 0.0.40
codegen_flags: <defaults>
</compile_context>

<pallas_src>
import jax
import jax.numpy as jnp
from jax.experimental import pallas as pl
from jax.experimental.pallas import tpu as pltpu


def _round_up(n, m):
    return ((n + m - 1) // m) * m


def readout_kernel(xt_ref, w1_ref, b1_ref, w2_ref, b2_ref, o_ref):
    # xt_ref: (128, TB) bf16  -- features on sublanes, batch on lanes
    # w1_ref: (64, 128) bf16,  b1_ref: (64, 1) f32
    # w2_ref: (1, 64)   f32,   b2_ref: (1, 1) f32
    # fc1 + ReLU  (MXU matmul: bf16 operands, f32 accumulation)
    h = jnp.dot(w1_ref[...], xt_ref[...], preferred_element_type=jnp.float32)
    h = jnp.maximum(h + b1_ref[...], 0.0)                      # (64, TB)
    # Dropout: eval-mode identity.
    # TODO(synk): training-mode dropout (pltpu.prng_random_bits mask) omitted.
    # fc2 + ReLU  (tiny [1,64]@[64,TB] matmul, kept in f32 for accuracy)
    y = jnp.dot(w2_ref[...], h, preferred_element_type=jnp.float32)
    o_ref[...] = jnp.maximum(y + b2_ref[...], 0.0)             # (1, TB) lane-dense


def readout_forward(x, w1, b1, w2, b2, *, tb=2048):
    """x: [B, 128]. Weights in PyTorch layout: w1 [64,128], b1 [64],
    w2 [1,64], b2 [1].  Returns [B] f32 (matches the trailing .squeeze())."""
    B = x.shape[0]
    # Batch tile lives on the lane axis: multiple of 128, capped by padded B.
    TB = min(tb, _round_up(B, 128))
    num_tiles = pl.cdiv(B, TB)
    B_pad = num_tiles * TB

    x_p = jnp.pad(x, ((0, B_pad - B), (0, 0))) if B_pad != B else x
    x_t = x_p.T.astype(jnp.bfloat16)                  # [128, B_pad], batch on lanes
    w1_b = w1.astype(jnp.bfloat16)                    # [64, 128]
    b1_c = b1.reshape(64, 1).astype(jnp.float32)      # broadcast over lanes
    w2_r = w2.reshape(1, 64).astype(jnp.float32)
    b2_c = b2.reshape(1, 1).astype(jnp.float32)

    const = lambda i: (0, 0)                          # weights resident across grid
    out = pl.pallas_call(
        readout_kernel,
        out_shape=jax.ShapeDtypeStruct((1, B_pad), jnp.float32),
        grid=(num_tiles,),
        in_specs=[
            pl.BlockSpec((128, TB), lambda i: (0, i)),   # x_t tile (double-buffered)
            pl.BlockSpec((64, 128), const),              # w1
            pl.BlockSpec((64, 1), const),                # b1
            pl.BlockSpec((1, 64), const),                # w2
            pl.BlockSpec((1, 1), const),                 # b2
        ],
        out_specs=pl.BlockSpec((1, TB), lambda i: (0, i)),  # lane-dense output
        compiler_params=pltpu.CompilerParams(
            dimension_semantics=("parallel",)),             # megacore on v7x
    )(x_t, w1_b, b1_c, w2_r, b2_c)
    # matches PyTorch .squeeze(): (B, 1) -> (B,)
    return out[0, :B]


def init_params(key):
    """PyTorch Linear init / shapes: fc1 W[64,128] b[64], fc2 W[1,64] b[1]."""
    k1, k2, k3, k4 = jax.random.split(key, 4)
    bound1 = 1.0 / jnp.sqrt(128.0)
    bound2 = 1.0 / jnp.sqrt(64.0)
    w1 = jax.random.uniform(k1, (64, 128), jnp.float32, -bound1, bound1)
    b1 = jax.random.uniform(k2, (64,), jnp.float32, -bound1, bound1)
    w2 = jax.random.uniform(k3, (1, 64), jnp.float32, -bound2, bound2)
    b2 = jax.random.uniform(k4, (1,), jnp.float32, -bound2, bound2)
    return w1, b1, w2, b2


def _reference(x, w1, b1, w2, b2):
    h = jnp.maximum(x @ w1.T + b1, 0.0)
    return jnp.maximum(h @ w2.T + b2, 0.0)[:, 0]


if __name__ == "__main__":
    key = jax.random.PRNGKey(0)
    kx, kx2, kp = jax.random.split(key, 3)
    w1, b1, w2, b2 = init_params(kp)

    # Small batch (single tile; batch padded 8 -> 128).
    B = 8
    x = jax.random.normal(kx, (B, 128), jnp.float32)
    y = readout_forward(x, w1, b1, w2, b2)
    jax.block_until_ready(y)
    ref = _reference(x, w1, b1, w2, b2)
    assert y.shape == (B,)
    assert jnp.allclose(y, ref, atol=2e-2, rtol=2e-2)   # bf16 inputs -> loose tol

    # Non-multiple-of-tile batch exercising a multi-step grid (300 rows, 3 tiles).
    B2 = 300
    x2 = jax.random.normal(kx2, (B2, 128), jnp.float32)
    y2 = readout_forward(x2, w1, b1, w2, b2, tb=128)
    jax.block_until_ready(y2)
    ref2 = _reference(x2, w1, b1, w2, b2)
    assert y2.shape == (B2,)
    assert jnp.allclose(y2, ref2, atol=2e-2, rtol=2e-2)

    print("KERNEL_OK")
</pallas_src>

<mosaic_0001>
module attributes {stable_mosaic.version = 11 : i64} {
  func.func @readout_kernel(%arg0: i32, %arg1: memref<128x128xbf16, #tpu.memory_space<vmem>>, %arg2: memref<64x128xbf16, #tpu.memory_space<vmem>>, %arg3: memref<64x1xf32, #tpu.memory_space<vmem>>, %arg4: memref<1x64xf32, #tpu.memory_space<vmem>>, %arg5: memref<1x1xf32, #tpu.memory_space<vmem>>, %arg6: memref<1x128xf32, #tpu.memory_space<vmem>>) attributes {dimension_semantics = [#tpu.dimension_semantics<parallel>], iteration_bounds = array<i64: 1>, scalar_prefetch = 0 : i64, scratch_operands = 0 : i64, tpu.core_type = #tpu.core_type<tc>, window_params = [{transform_indices = @transform_0, window_bounds = array<i64: 128, 128>}, {pipeline_mode = #tpu.pipeline_mode<synchronous>, transform_indices = @transform_1, window_bounds = array<i64: 64, 128>}, {pipeline_mode = #tpu.pipeline_mode<synchronous>, transform_indices = @transform_2, window_bounds = array<i64: 64, 1>}, {pipeline_mode = #tpu.pipeline_mode<synchronous>, transform_indices = @transform_3, window_bounds = array<i64: 1, 64>}, {pipeline_mode = #tpu.pipeline_mode<synchronous>, transform_indices = @transform_4, window_bounds = array<i64: 1, 1>}, {transform_indices = @transform_5, window_bounds = array<i64: 1, 128>}]} {
    %c0 = arith.constant 0 : index
    %c0_0 = arith.constant 0 : index
    %0 = vector.load %arg2[%c0, %c0_0] : memref<64x128xbf16, #tpu.memory_space<vmem>>, vector<64x128xbf16>
    %c0_1 = arith.constant 0 : index
    %c0_2 = arith.constant 0 : index
    %1 = vector.load %arg1[%c0_1, %c0_2] : memref<128x128xbf16, #tpu.memory_space<vmem>>, vector<128x128xbf16>
    %cst = arith.constant dense<0.000000e+00> : vector<64x128xf32>
    %2 = tpu.matmul %0, %1, %cst {dimension_numbers = #tpu.dot_dimension_numbers<[1], [0], [0], [1], [0, 0, 1, 1], [], []>} : vector<64x128xbf16>, vector<128x128xbf16>, vector<64x128xf32> -> vector<64x128xf32>
    %c0_3 = arith.constant 0 : index
    %c0_4 = arith.constant 0 : index
    %3 = vector.load %arg3[%c0_3, %c0_4] : memref<64x1xf32, #tpu.memory_space<vmem>>, vector<64x1xf32>
    %4 = vector.broadcast %3 : vector<64x1xf32> to vector<64x128xf32>
    %5 = arith.addf %2, %4 : vector<64x128xf32>
    %cst_5 = arith.constant 0.000000e+00 : f32
    %6 = vector.broadcast %cst_5 : f32 to vector<64x128xf32>
    %7 = arith.maximumf %5, %6 : vector<64x128xf32>
    %c0_6 = arith.constant 0 : index
    %c0_7 = arith.constant 0 : index
    %8 = vector.load %arg4[%c0_6, %c0_7] : memref<1x64xf32, #tpu.memory_space<vmem>>, vector<1x64xf32>
    %cst_8 = arith.constant dense<0.000000e+00> : vector<1x128xf32>
    %9 = tpu.matmul %8, %7, %cst_8 {dimension_numbers = #tpu.dot_dimension_numbers<[1], [0], [0], [1], [0, 0, 1, 1], [], []>} : vector<1x64xf32>, vector<64x128xf32>, vector<1x128xf32> -> vector<1x128xf32>
    %c0_9 = arith.constant 0 : index
    %c0_10 = arith.constant 0 : index
    %10 = vector.load %arg5[%c0_9, %c0_10] : memref<1x1xf32, #tpu.memory_space<vmem>>, vector<1x1xf32>
    %11 = vector.broadcast %10 : vector<1x1xf32> to vector<1x128xf32>
    %12 = arith.addf %9, %11 : vector<1x128xf32>
    %cst_11 = arith.constant 0.000000e+00 : f32
    %13 = vector.broadcast %cst_11 : f32 to vector<1x128xf32>
    %14 = arith.maximumf %12, %13 : vector<1x128xf32>
    %c0_12 = arith.constant 0 : index
    %c0_13 = arith.constant 0 : index
    %15 = vector.load %arg6[%c0_12, %c0_13] : memref<1x128xf32, #tpu.memory_space<vmem>>, vector<1x128xf32>
    tpu.vector_store %arg6[%c0_12, %c0_13], %14 {strides = array<i32>} : memref<1x128xf32, #tpu.memory_space<vmem>>, vector<1x128xf32>,
    return
  }
  func.func @transform_0(%arg0: i32) -> (i32, i32) {
    %c0_i32 = arith.constant 0 : i32
    %c0_i32_0 = arith.constant 0 : i32
    return %c0_i32, %arg0 : i32, i32
  }
  func.func @transform_1(%arg0: i32) -> (i32, i32) {
    %c0_i32 = arith.constant 0 : i32
    %c0_i32_0 = arith.constant 0 : i32
    %c0_i32_1 = arith.constant 0 : i32
    return %c0_i32, %c0_i32_0 : i32, i32
  }
  func.func @transform_2(%arg0: i32) -> (i32, i32) {
    %c0_i32 = arith.constant 0 : i32
    %c0_i32_0 = arith.constant 0 : i32
    %c0_i32_1 = arith.constant 0 : i32
    return %c0_i32, %c0_i32_0 : i32, i32
  }
  func.func @transform_3(%arg0: i32) -> (i32, i32) {
    %c0_i32 = arith.constant 0 : i32
    %c0_i32_0 = arith.constant 0 : i32
    %c0_i32_1 = arith.constant 0 : i32
    return %c0_i32, %c0_i32_0 : i32, i32
  }
  func.func @transform_4(%arg0: i32) -> (i32, i32) {
    %c0_i32 = arith.constant 0 : i32
    %c0_i32_0 = arith.constant 0 : i32
    %c0_i32_1 = arith.constant 0 : i32
    return %c0_i32, %c0_i32_0 : i32, i32
  }
  func.func @transform_5(%arg0: i32) -> (i32, i32) {
    %c0_i32 = arith.constant 0 : i32
    %c0_i32_0 = arith.constant 0 : i32
    return %c0_i32, %arg0 : i32, i32
  }
}

</mosaic_0001>

<llo_original>
// kernel: tpu_custom_call.1
$region0: #{tpu_custom_call.1}
  #allocation0 [shape = 'u32[]', space=smem, size = 0x4, offset = 0x4, fixed_abs, tag = 'smem constant byte address 0x4 - core index']
  #allocation1 [shape = 'u32[144,128]{1,0:T(1,128)}', space=vmem, size = 0x12000, scoped, tag = 'internal scratch']
  #allocation2 [shape = 'f32[1,1]{1,0:T(1,128)S(1)}', space=vmem, size = 0x200, scoped, tag = 'scoped memory for tpu_custom_call.1']
  %s0 = inlined_call_operand.vmem [shape: bf16[128,128], index: 0, kind: input, shape index: {}]
  %s1 = inlined_call_operand.hbm [shape: bf16[64,128], index: 1, kind: input, shape index: {}]
  %s2 = inlined_call_operand.vmem [shape: f32[64,1], index: 2, kind: input, shape index: {}]
  %s3 = inlined_call_operand.vmem [shape: f32[1,64], index: 3, kind: input, shape index: {}]
  %s4 = inlined_call_operand.<no memory space> [shape: f32[1,1], index: 4, kind: input, shape index: {}]
  %s5 = inlined_call_operand.hbm [shape: f32[1,128], index: 5, kind: output, shape index: {}]
  %s6 = sld [smem:[#allocation0]]
  $region34: #{tpu_custom_call.1} parent=0
    _
  %s8 = ssub.s32 1, %s6
  %s9 = scalar_select 0, %s8, %s6
  %v10 = vstv %s4
  %11 = vst [vmem:[#allocation2] sm:$0x1] %v10
  $region1: #{tpu_custom_call.1} parent=0
    #allocation3 [shape = 'u8[16384]{0}', space=vmem, size = 0x4000, scoped, tag = 'input window, operand 1, single buffered']
    #allocation4 [shape = 's32[1]{0}', space=sflag, size = 0x4, scoped, tag = 'scoped memory for tpu_custom_call.1']
    #allocation5 [shape = 's32[1]{0}', space=sflag, size = 0x4, scoped, tag = 'scoped memory for tpu_custom_call.1']
    #allocation6 [shape = 'u8[512]{0}', space=vmem, size = 0x400, scoped, tag = 'output window, operand 0, single buffered']
    %12 = vsyncpa [#allocation4], 0
    %13 = vsyncpa [#allocation5], 0
    // Predicated region
    $region2: #{tpu_custom_call.1} parent=1 // pred_check
      _
    $region3: #{tpu_custom_call.1} parent=1 // pred_check_branch
      %15 = sbr.rel (0) target = $region5
    $region4: #{tpu_custom_call.1} parent=1 // pred_region
      _
    $region5: #{tpu_custom_call.1} parent=1 // pred_fallthru
      _
    // Predicated region
    $region6: #{tpu_custom_call.1} parent=1 // pred_check
      _
    $region7: #{tpu_custom_call.1} parent=1 // pred_check_branch
      %17 = sbr.rel (0) target = $region9
    $region8: #{tpu_custom_call.1} parent=1 // pred_region
      %s19 = ssub.s32 512, 512
      %20 = vsyncadd [#allocation4], %s19
      %s21 = sshll.u32 [#allocation3], 4
      %s22 = int_to_ptr.vmem [resolvable:$true] %s21
      %27 = dma.hbm_to_vmem [thread:$0]  %s1, 512, %s22, [#allocation4], 64, 64, 4
    $region9: #{tpu_custom_call.1} parent=1 // pred_fallthru
      _
    // Predicated region
    $region10: #{tpu_custom_call.1} parent=1 // pred_check
      _
    $region11: #{tpu_custom_call.1} parent=1 // pred_check_branch
      %29 = sbr.rel (0) target = $region13
    $region12: #{tpu_custom_call.1} parent=1 // pred_region
      _
    $region13: #{tpu_custom_call.1} parent=1 // pred_fallthru
      _
    // Predicated region
    $region14: #{tpu_custom_call.1} parent=1 // pred_check
      _
    $region15: #{tpu_custom_call.1} parent=1 // pred_check_branch
      %31 = sbr.rel (0) target = $region17
    $region16: #{tpu_custom_call.1} parent=1 // pred_region
      _
    $region17: #{tpu_custom_call.1} parent=1 // pred_fallthru
      _
    // Predicated region
    $region18: #{tpu_custom_call.1} parent=1 // pred_check
      _
    $region19: #{tpu_custom_call.1} parent=1 // pred_check_branch
      %33 = sbr.rel (0) target = $region21
    $region20: #{tpu_custom_call.1} parent=1 // pred_region
      _
    $region21: #{tpu_custom_call.1} parent=1 // pred_fallthru
      _
    // Predicated region
    $region22: #{tpu_custom_call.1} parent=1 // pred_check
      _
    $region23: #{tpu_custom_call.1} parent=1 // pred_check_branch
      %35 = sbr.rel (0) target = $region25
    $region24: #{tpu_custom_call.1} parent=1 // pred_region
      %36 = dma.done [#allocation4], 512
    $region25: #{tpu_custom_call.1} parent=1 // pred_fallthru
      _
    %v38 = vld [vmem:[#allocation3] sm:$0xf]
    %v39 = vld [vmem:[#allocation3 + $0x4] sm:$0xf]
    %v40 = vld [vmem:[#allocation3 + $0x8] sm:$0xf]
    %v41 = vld [vmem:[#allocation3 + $0xc] sm:$0xf]
    %v42 = vld [vmem:[#allocation3 + $0x10] sm:$0xf]
    %v43 = vld [vmem:[#allocation3 + $0x14] sm:$0xf]
    %v44 = vld [vmem:[#allocation3 + $0x18] sm:$0xf]
    %v45 = vld [vmem:[#allocation3 + $0x1c] sm:$0xf]
    %v46 = vld [vmem:[%s0] sm:$0xf]
    %v47 = vld [vmem:[%s0 + $0x4] sm:$0xf]
    %v48 = vld [vmem:[%s0 + $0x8] sm:$0xf]
    %v49 = vld [vmem:[%s0 + $0xc] sm:$0xf]
    %v50 = vld [vmem:[%s0 + $0x10] sm:$0xf]
    %v51 = vld [vmem:[%s0 + $0x14] sm:$0xf]
    %v52 = vld [vmem:[%s0 + $0x18] sm:$0xf]
    %v53 = vld [vmem:[%s0 + $0x1c] sm:$0xf]
    %v54 = vld [vmem:[%s0 + $0x20] sm:$0xf]
    %v55 = vld [vmem:[%s0 + $0x24] sm:$0xf]
    %v56 = vld [vmem:[%s0 + $0x28] sm:$0xf]
    %v57 = vld [vmem:[%s0 + $0x2c] sm:$0xf]
    %v58 = vld [vmem:[%s0 + $0x30] sm:$0xf]
    %v59 = vld [vmem:[%s0 + $0x34] sm:$0xf]
    %v60 = vld [vmem:[%s0 + $0x38] sm:$0xf]
    %v61 = vld [vmem:[%s0 + $0x3c] sm:$0xf]
    %v62 = vld [vmem:[%s2] sm:$0xff]
    %v63 = vld [vmem:[%s2 + $0x8] sm:$0xff]
    %v64 = vld [vmem:[%s2 + $0x10] sm:$0xff]
    %v65 = vld [vmem:[%s2 + $0x18] sm:$0xff]
    %v66 = vld [vmem:[%s2 + $0x20] sm:$0xff]
    %v67 = vld [vmem:[%s2 + $0x28] sm:$0xff]
    %v68 = vld [vmem:[%s2 + $0x30] sm:$0xff]
    %v69 = vld [vmem:[%s2 + $0x38] sm:$0xff]
    %71 = vset.pattern.permute.xlu0 0
    %72 = vperm.xlu0 %71, %v62
    %v73 = vpop.permute.xlu0 %72
    %76 = vset.pattern.permute.xlu0 0
    %77 = vperm.xlu0 %76, %v63
    %v78 = vpop.permute.xlu0 %77
    %81 = vset.pattern.permute.xlu0 0
    %82 = vperm.xlu0 %81, %v64
    %v83 = vpop.permute.xlu0 %82
    %86 = vset.pattern.permute.xlu0 0
    %87 = vperm.xlu0 %86, %v65
    %v88 = vpop.permute.xlu0 %87
    %91 = vset.pattern.permute.xlu0 0
    %92 = vperm.xlu0 %91, %v66
    %v93 = vpop.permute.xlu0 %92
    %96 = vset.pattern.permute.xlu0 0
    %97 = vperm.xlu0 %96, %v67
    %v98 = vpop.permute.xlu0 %97
    %101 = vset.pattern.permute.xlu0 0
    %102 = vperm.xlu0 %101, %v68
    %v103 = vpop.permute.xlu0 %102
    %106 = vset.pattern.permute.xlu0 0
    %107 = vperm.xlu0 %106, %v69
    %v108 = vpop.permute.xlu0 %107
    %v118 = vunpack.c.l.b16 %v38
    %v119 = vunpack.c.l.b16 %v39
    %v120 = vunpack.c.l.b16 %v40
    %v121 = vunpack.c.l.b16 %v41
    %v122 = vunpack.c.l.b16 %v42
    %v123 = vunpack.c.l.b16 %v43
    %v124 = vunpack.c.l.b16 %v44
    %v125 = vunpack.c.l.b16 %v45
    %v126 = vpack.c.b16 %v119, %v118
    %v127 = vpack.c.b16 %v121, %v120
    %v128 = vpack.c.b16 %v123, %v122
    %v129 = vpack.c.b16 %v125, %v124
    %v150 = vunpack.c.l.b16 %v46
    %v151 = vunpack.c.l.b16 %v47
    %v152 = vunpack.c.l.b16 %v48
    %v153 = vunpack.c.l.b16 %v49
    %v154 = vunpack.c.l.b16 %v50
    %v155 = vunpack.c.l.b16 %v51
    %v156 = vunpack.c.l.b16 %v52
    %v157 = vunpack.c.l.b16 %v53
    %v158 = vunpack.c.l.b16 %v54
    %v159 = vunpack.c.l.b16 %v55
    %v160 = vunpack.c.l.b16 %v56
    %v161 = vunpack.c.l.b16 %v57
    %v162 = vunpack.c.l.b16 %v58
    %v163 = vunpack.c.l.b16 %v59
    %v164 = vunpack.c.l.b16 %v60
    %v165 = vunpack.c.l.b16 %v61
    %v166 = vpack.c.b16 %v151, %v150
    %v167 = vpack.c.b16 %v153, %v152
    %v168 = vpack.c.b16 %v155, %v154
    %v169 = vpack.c.b16 %v157, %v156
    %v170 = vpack.c.b16 %v159, %v158
    %v171 = vpack.c.b16 %v161, %v160
    %v172 = vpack.c.b16 %v163, %v162
    %v173 = vpack.c.b16 %v165, %v164
    %182 = vmatprep.subr.bf16.mxu0 0
    %183 = vmatpush1.bf16.msra.mxu0 %v166
    %184 = vmatprep.subr.bf16.mxu0 0
    %185 = vmatpush1.bf16.msra.mxu0 %v167
    %186 = vmatprep.subr.bf16.mxu0 0
    %187 = vmatpush1.bf16.msra.mxu0 %v168
    %188 = vmatprep.subr.bf16.mxu0 0
    %189 = vmatpush1.bf16.msra.mxu0 %v169
    %190 = vmatprep.subr.bf16.mxu0 0
    %191 = vmatpush1.bf16.msra.mxu0 %v170
    %192 = vmatprep.subr.bf16.mxu0 0
    %193 = vmatpush1.bf16.msra.mxu0 %v171
    %194 = vmatprep.subr.bf16.mxu0 0
    %195 = vmatpush1.bf16.msra.mxu0 %v172
    %196 = vmatprep.subr.bf16.mxu0 0
    %197 = vmatpush1.bf16.msra.mxu0 %v173
    %198 = vmatprep.subr.bf16.mxu0 0
    %199 = vmatpush1.bf16.msra.mxu0 0
    %200 = vmatprep.subr.bf16.mxu0 0
    %201 = vmatpush1.bf16.msra.mxu0 0
    %202 = vmatprep.subr.bf16.mxu0 0
    %203 = vmatpush1.bf16.msra.mxu0 0
    %204 = vmatprep.subr.bf16.mxu0 0
    %205 = vmatpush1.bf16.msra.mxu0 0
    %206 = vmatprep.subr.bf16.mxu0 0
    %207 = vmatpush1.bf16.msra.mxu0 0
    %208 = vmatprep.subr.bf16.mxu0 0
    %209 = vmatpush1.bf16.msra.mxu0 0
    %210 = vmatprep.subr.bf16.mxu0 0
    %211 = vmatpush1.bf16.msra.mxu0 0
    %212 = vmatprep.subr.bf16.mxu0 0
    %213 = vmatpush1.bf16.msra.mxu0 0
    %214 = vmatprep.mubr.bf16.mxu0 0
    %215 = vmatmul.mubr.bf16.gmra.mrb[0].mxu0 %v126
    %v216 = vpop.f32.mrb[0].mxu0
    %v217 = vadd.f32 %v73, %v216
    %v218 = vpop.f32.mrb[0].mxu0
    %v219 = vpop.f32.mrb[0].mxu0
    %v220 = vadd.f32 %v78, %v219
    %v221 = vpop.f32.mrb[0].mxu0
    %222 = vmatprep.mubr.bf16.mxu0 0
    %223 = vmatmul.mubr.bf16.gmra.mrb[0].mxu0 %v127
    %v224 = vpop.f32.mrb[0].mxu0
    %v225 = vadd.f32 %v83, %v224
    %v226 = vpop.f32.mrb[0].mxu0
    %v227 = vpop.f32.mrb[0].mxu0
    %v228 = vadd.f32 %v88, %v227
    %v229 = vpop.f32.mrb[0].mxu0
    %230 = vmatprep.mubr.bf16.mxu0 0
    %231 = vmatmul.mubr.bf16.gmra.mrb[0].mxu0 %v128
    %v232 = vpop.f32.mrb[0].mxu0
    %v233 = vadd.f32 %v93, %v232
    %v234 = vpop.f32.mrb[0].mxu0
    %v235 = vpop.f32.mrb[0].mxu0
    %v236 = vadd.f32 %v98, %v235
    %v237 = vpop.f32.mrb[0].mxu0
    %238 = vmatprep.mubr.bf16.mxu0 0
    %239 = vmatmul.mubr.bf16.gmra.mrb[0].mxu0 %v129
    %v240 = vpop.f32.mrb[0].mxu0
    %v241 = vadd.f32 %v103, %v240
    %v242 = vpop.f32.mrb[0].mxu0
    %v243 = vpop.f32.mrb[0].mxu0
    %v244 = vadd.f32 %v108, %v243
    %v245 = vpop.f32.mrb[0].mxu0
    %246 = vdwg.mxu0
    %v247 = vmax.f32 %v217, 0.0
    %v248 = vmax.f32 %v220, 0.0
    %v249 = vmax.f32 %v225, 0.0
    %v250 = vmax.f32 %v228, 0.0
    %v251 = vmax.f32 %v233, 0.0
    %v252 = vmax.f32 %v236, 0.0
    %v253 = vmax.f32 %v241, 0.0
    %v254 = vmax.f32 %v244, 0.0
    %v255 = vld [vmem:[%s3] sm:$0x1]
    %v256 = vld [vmem:[#allocation2] sm:$0x1]
    %258 = vset.pattern.permute.xlu0 0
    %259 = vperm.xlu0 %258, %v256
    %v260 = vpop.permute.xlu0 %259
    %v262 = vlaneseq
    %v263 = vshrl.u32 %v262, 7
    %v264 = vsub.s32 0, %v263
    %v265 = vrot.slane %v260, %v264
    %vm266 = vcmask 523264
    %v268 = vsel %vm266, %v255, 0
    %270 = vmatprep.subr.mxu0 0.0
    %271 = vmatpush1.msra.mxu0 %v247
    %272 = vmatprep.subr.mxu0 0.0
    %273 = vmatpush1.msra.mxu0 %v248
    %274 = vmatprep.subr.mxu0 0.0
    %275 = vmatpush1.msra.mxu0 %v249
    %276 = vmatprep.subr.mxu0 0.0
    %277 = vmatpush1.msra.mxu0 %v250
    %278 = vmatprep.subr.mxu0 0.0
    %279 = vmatpush1.msra.mxu0 %v251
    %280 = vmatprep.subr.mxu0 0.0
    %281 = vmatpush1.msra.mxu0 %v252
    %282 = vmatprep.subr.mxu0 0.0
    %283 = vmatpush1.msra.mxu0 %v253
    %284 = vmatprep.subr.mxu0 0.0
    %285 = vmatpush1.msra.mxu0 %v254
    %286 = vmatprep.subr.mxu0 0.0
    %287 = vmatpush1.msra.mxu0 0.0
    %288 = vmatprep.subr.mxu0 0.0
    %289 = vmatpush1.msra.mxu0 0.0
    %290 = vmatprep.subr.mxu0 0.0
    %291 = vmatpush1.msra.mxu0 0.0
    %292 = vmatprep.subr.mxu0 0.0
    %293 = vmatpush1.msra.mxu0 0.0
    %294 = vmatprep.subr.mxu0 0.0
    %295 = vmatpush1.msra.mxu0 0.0
    %296 = vmatprep.subr.mxu0 0.0
    %297 = vmatpush1.msra.mxu0 0.0
    %298 = vmatprep.subr.mxu0 0.0
    %299 = vmatpush1.msra.mxu0 0.0
    %300 = vmatprep.subr.mxu0 0.0
    %301 = vmatpush1.msra.mxu0 0.0
    %302 = vmatprep.subr.mxu0 0.0
    %303 = vmatpush1.msra.mxu0 0.0
    %304 = vmatprep.subr.mxu0 0.0
    %305 = vmatpush1.msra.mxu0 0.0
    %306 = vmatprep.subr.mxu0 0.0
    %307 = vmatpush1.msra.mxu0 0.0
    %308 = vmatprep.subr.mxu0 0.0
    %309 = vmatpush1.msra.mxu0 0.0
    %310 = vmatprep.subr.mxu0 0.0
    %311 = vmatpush1.msra.mxu0 0.0
    %312 = vmatprep.subr.mxu0 0.0
    %313 = vmatpush1.msra.mxu0 0.0
    %314 = vmatprep.subr.mxu0 0.0
    %315 = vmatpush1.msra.mxu0 0.0
    %316 = vmatprep.subr.mxu0 0.0
    %317 = vmatpush1.msra.mxu0 0.0
    %318 = vmatprep.subr.mxu0 0.0
    %319 = vmatpush1.msra.mxu0 0.0
    %320 = vmatprep.subr.mxu0 0.0
    %321 = vmatpush1.msra.mxu0 0.0
    %322 = vmatprep.subr.mxu0 0.0
    %323 = vmatpush1.msra.mxu0 0.0
    %324 = vmatprep.subr.mxu0 0.0
    %325 = vmatpush1.msra.mxu0 0.0
    %326 = vmatprep.subr.mxu0 0.0
    %327 = vmatpush1.msra.mxu0 0.0
    %328 = vmatprep.subr.mxu0 0.0
    %329 = vmatpush1.msra.mxu0 0.0
    %330 = vmatprep.subr.mxu0 0.0
    %331 = vmatpush1.msra.mxu0 0.0
    %332 = vmatprep.subr.mxu0 0.0
    %333 = vmatpush1.msra.mxu0 0.0
    %334 = vmatprep.mubr.f32.mxu0 0.0
    %335 = vmatmul.mubr.f32.gmra.mrb[0].mxu0 %v268
    %v336 = vpop.f32.mrb[0].mxu0
    %v337 = vadd.f32 %v265, %v336
    %v338 = vpop.f32.mrb[0].mxu0
    %339 = vdwg.mxu0
    %v340 = vmax.f32 %v337, 0.0
    %341 = vst [vmem:[#allocation6] sm:$0x1] %v340
    // Predicated region
    $region26: #{tpu_custom_call.1} parent=1 // pred_check
      _
    $region27: #{tpu_custom_call.1} parent=1 // pred_check_branch
      %343 = sbr.rel (0) target = $region29
    $region28: #{tpu_custom_call.1} parent=1 // pred_region
      %s345 = ssub.s32 16, 16
      %346 = vsyncadd [#allocation5], %s345
      %s348 = sshll.u32 [#allocation6], 4
      %s349 = int_to_ptr.vmem [resolvable:$true] %s348
      %351 = dma.vmem_to_hbm [thread:$0]  %s349, 16, %s5, [#allocation5]
    $region29: #{tpu_custom_call.1} parent=1 // pred_fallthru
      _
    // Predicated region
    $region30: #{tpu_custom_call.1} parent=1 // pred_check
      _
    $region31: #{tpu_custom_call.1} parent=1 // pred_check_branch
      %353 = sbr.rel (0) target = $region33
    $region32: #{tpu_custom_call.1} parent=1 // pred_region
      %354 = dma.done [#allocation5], 16
    $region33: #{tpu_custom_call.1} parent=1 // pred_fallthru
      _
    %355 = vsyncpa [#allocation4], 1
    %356 = vsyncpa [#allocation5], 1

</llo_original>
